<compile_context>
chip_gen: v7x
topology: tpu7x:2x2x1
jax: 0.10.0
libtpu: 0.0.40
codegen_flags: <defaults>
</compile_context>

<pallas_src>
import jax
import jax.numpy as jnp
from jax.experimental import pallas as pl
from jax.experimental.pallas import tpu as pltpu

# ---- fixed hyper-parameters (compile-time constants closed over by the kernel) ----
BETA_MIN = 0.1
BETA_MAX = 5.0
SCALE_SCORE = 1.0
CLIP_MODEL = 10.0
CLIP_SCORE = 10.0
EPS = 1e-24  # added to the squared norm (== (1e-12)^2 on the norm scale)


def _round_up(n, m):
    return ((n + m - 1) // m) * m


def _clip_norm(v, max_norm):
    # per-row L2-norm clip; single EUP rsqrt, no divide
    sumsq = jnp.sum(v * v, axis=-1, keepdims=True)
    scale = jnp.minimum(jnp.float32(1.0), max_norm * jax.lax.rsqrt(sumsq + EPS))
    return v * scale


# ------------------------------- kernel body ---------------------------------
def cancel_drift_kernel(
    t_ref, x_ref,
    w1_ref,                 # (D, 2*Hp)  fused first layer [base | score], mxu dtype
    tb1_ref,                # (2, 2*Hp)  row 0 = fused w1t, row 1 = fused b1, f32
    w2b_ref, w2s_ref,       # (Hp, D)    second layers, mxu dtype
    b2_ref,                 # (2, D)     row 0 = b2_base, row 1 = b2_score, f32
    o_ref,
):
    mxu_dtype = w1_ref.dtype
    t = t_ref[...]                                     # (TB, 1)  f32
    x = x_ref[...]                                     # (TB, D)  f32

    tb1 = tb1_ref[...]
    w1t = tb1[0:1, :]                                  # (1, 2*Hp)
    b1 = tb1[1:2, :]                                   # (1, 2*Hp)
    b2 = b2_ref[...]

    # Fused first layer of both MLPs: one MXU push; rank-1 t-term as a VPU broadcast.
    z = jnp.dot(x.astype(mxu_dtype), w1_ref[...], preferred_element_type=jnp.float32)
    z = z + t * w1t + b1                               # (TB, 2*Hp) f32
    hp = z.shape[-1] // 2                              # Hp multiple of 128 -> aligned slice

    # Process the two halves one at a time (keeps the live tanh slab at (TB, Hp)).
    h_b = jnp.tanh(z[:, :hp]).astype(mxu_dtype)
    ctrl = _clip_norm(
        jnp.dot(h_b, w2b_ref[...], preferred_element_type=jnp.float32) + b2[0:1, :],
        CLIP_MODEL,
    )

    h_s = jnp.tanh(z[:, hp:]).astype(mxu_dtype)
    score_model_out = _clip_norm(
        jnp.dot(h_s, w2s_ref[...], preferred_element_type=jnp.float32) + b2[1:2, :],
        CLIP_MODEL,
    )

    # target_score(x) = -x. Its clip scale is sign-invariant, so compute it from x and
    # carry the minus sign into the combine (saves a full (TB, D) negate pass).
    sumsq = jnp.sum(x * x, axis=-1, keepdims=True)
    s_tgt = jnp.minimum(jnp.float32(1.0), CLIP_SCORE * jax.lax.rsqrt(sumsq + EPS))

    # OU SDE; drift/diff = -0.5*sqrt(beta)*x, score = SCALE_SCORE*s_tgt*(-x)*score_model:
    #   out = ctrl + drift/diff + 0.5*diff*score
    #       = ctrl - 0.5*diff*x*(1 + SCALE_SCORE*s_tgt*score_model)
    beta = BETA_MIN + t * (BETA_MAX - BETA_MIN)        # (TB, 1)
    diff = jnp.sqrt(beta)                              # (TB, 1)
    o_ref[...] = ctrl - (0.5 * diff) * x * (1.0 + SCALE_SCORE * s_tgt * score_model_out)


# -------------------------- one-time weight packing ---------------------------
def pack_params(params, *, mxu_dtype=jnp.bfloat16):
    """Pack/pad the MLP weights ONCE (hoisted out of the per-call path).

    Only the hidden dim is padded (to a multiple of 128) so the fused first-layer
    output slices are lane-tile aligned; the feature dim D stays unpadded.
    MXU matmul operands get mxu_dtype (bf16 by default); bias/t rows stay f32.
    """
    f32 = jnp.float32
    D, H = params["w1x_b"].shape
    Hp = _round_up(H, 128)

    W1 = jnp.zeros((D, 2 * Hp), f32)
    W1 = W1.at[:, :H].set(params["w1x_b"]).at[:, Hp:Hp + H].set(params["w1x_s"])

    tb1 = jnp.zeros((2, 2 * Hp), f32)
    tb1 = tb1.at[0, :H].set(params["w1t_b"][0]).at[0, Hp:Hp + H].set(params["w1t_s"][0])
    tb1 = tb1.at[1, :H].set(params["b1_b"][0]).at[1, Hp:Hp + H].set(params["b1_s"][0])

    W2b = jnp.zeros((Hp, D), f32).at[:H, :].set(params["w2_b"])
    W2s = jnp.zeros((Hp, D), f32).at[:H, :].set(params["w2_s"])
    b2 = jnp.stack([params["b2_b"][0], params["b2_s"][0]], axis=0).astype(f32)  # (2, D)

    return {
        "W1": W1.astype(mxu_dtype),
        "tb1": tb1,
        "W2b": W2b.astype(mxu_dtype),
        "W2s": W2s.astype(mxu_dtype),
        "b2": b2,
    }


# --------------------------------- wrapper ------------------------------------
def cancel_drift_ctrl(t, x, packed, *, tb=1024):
    """t: (B,1) f32, x: (B,D) f32, packed: output of pack_params (call once)."""
    f32 = jnp.float32
    B, D = x.shape
    W1 = packed["W1"]
    Hp2 = W1.shape[1]                 # 2 * Hp
    Hp = Hp2 // 2

    # Batch tile: big enough to amortize per-step overhead; >= 2 grid steps when the
    # batch allows it so both v7x TensorCores get work under ("parallel",).
    if B >= 16:
        tb_eff = min(tb, _round_up((B + 1) // 2, 8))
    else:
        tb_eff = _round_up(B, 8)
    Bp = _round_up(B, tb_eff)

    # Only the batch dim is (possibly) padded; the feature dim D is left untouched,
    # avoiding the 8x HBM traffic inflation of padding x/out to 128 lanes at small D.
    if Bp != B:
        x_in = jnp.zeros((Bp, D), f32).at[:B].set(x.astype(f32))
        t_in = jnp.zeros((Bp, 1), f32).at[:B].set(t.astype(f32))
    else:
        x_in = x.astype(f32)
        t_in = t.astype(f32)

    # VMEM budget: single-buffered weights + double-buffered io tiles + intermediates,
    # with 2x headroom; floor 32 MiB, capped at v7x's 64 MiB physical VMEM.
    nbytes = lambda a: a.size * a.dtype.itemsize
    weight_bytes = sum(nbytes(packed[k]) for k in ("W1", "tb1", "W2b", "W2s", "b2"))
    io_tile_bytes = tb_eff * (2 * D + 1) * 4
    interm_bytes = tb_eff * (Hp2 + Hp + 4 * D) * 4
    est = weight_bytes + 2 * io_tile_bytes + interm_bytes
    vmem_limit = int(min(max(2 * est, 32 << 20), 64 << 20))

    batched = lambda shape: pl.BlockSpec(shape, lambda i: (i,) + (0,) * (len(shape) - 1))
    # Grid-invariant weights: single-buffer them (no benefit from double-buffering a
    # block that is revisited every step), which matters most on v7x's 64 MiB VMEM.
    invariant = lambda shape: pl.BlockSpec(
        shape, lambda i: (0,) * len(shape), pipeline_mode=pl.Buffered(1)
    )

    grid_spec = pltpu.PrefetchScalarGridSpec(
        num_scalar_prefetch=0,
        grid=(Bp // tb_eff,),
        in_specs=[
            batched((tb_eff, 1)),        # t
            batched((tb_eff, D)),        # x (full-D block: no lane padding in HBM)
            invariant((D, Hp2)),         # fused W1
            invariant((2, Hp2)),         # fused (w1t, b1)
            invariant((Hp, D)),          # W2 base
            invariant((Hp, D)),          # W2 score
            invariant((2, D)),           # stacked (b2_base, b2_score)
        ],
        out_specs=batched((tb_eff, D)),
    )

    out = pl.pallas_call(
        cancel_drift_kernel,
        out_shape=jax.ShapeDtypeStruct((Bp, D), f32),
        grid_spec=grid_spec,
        compiler_params=pltpu.CompilerParams(
            dimension_semantics=("parallel",),
            vmem_limit_bytes=vmem_limit,
        ),
    )(t_in, x_in, packed["W1"], packed["tb1"], packed["W2b"], packed["W2s"], packed["b2"])

    return out if Bp == B else out[:B]


# ------------------------------ pure-JAX reference ----------------------------
def _reference(t, x, params):
    """Pure-JAX reference of the original (unsimplified) forward, unpadded, f32."""
    def mlp(pfx):
        h = jnp.tanh(
            x @ params[f"w1x_{pfx}"] + t * params[f"w1t_{pfx}"] + params[f"b1_{pfx}"]
        )
        return h @ params[f"w2_{pfx}"] + params[f"b2_{pfx}"]

    ctrl = _clip_norm(mlp("b"), CLIP_MODEL)
    score = SCALE_SCORE * _clip_norm(-x, CLIP_SCORE)
    score = score * _clip_norm(mlp("s"), CLIP_MODEL)
    beta = BETA_MIN + t * (BETA_MAX - BETA_MIN)
    drift = -0.5 * beta * x
    diff = jnp.sqrt(beta)
    return ctrl + drift / diff + 0.5 * diff * score


def make_params(key, D, H):
    keys = jax.random.split(key, 8)
    s1 = 1.0 / jnp.sqrt(D + 1.0)
    s2 = 1.0 / jnp.sqrt(float(H))
    return {
        "w1x_b": jax.random.normal(keys[0], (D, H), jnp.float32) * s1,
        "w1t_b": jax.random.normal(keys[1], (1, H), jnp.float32) * s1,
        "b1_b": jnp.zeros((1, H), jnp.float32),
        "w2_b": jax.random.normal(keys[2], (H, D), jnp.float32) * s2,
        "b2_b": jnp.zeros((1, D), jnp.float32),
        "w1x_s": jax.random.normal(keys[3], (D, H), jnp.float32) * s1,
        "w1t_s": jax.random.normal(keys[4], (1, H), jnp.float32) * s1,
        "b1_s": jnp.zeros((1, H), jnp.float32),
        "w2_s": jax.random.normal(keys[5], (H, D), jnp.float32) * s2,
        "b2_s": jnp.zeros((1, D), jnp.float32),
    }


if __name__ == "__main__":
    B, D, H = 8, 16, 32
    key = jax.random.PRNGKey(0)
    k_t, k_x, k_p = jax.random.split(key, 3)

    t = jax.random.uniform(k_t, (B, 1), jnp.float32, minval=0.05, maxval=0.95)
    x = jax.random.normal(k_x, (B, D), jnp.float32)
    params = make_params(k_p, D, H)
    ref = jax.block_until_ready(_reference(t, x, params))

    # f32 MXU path: tight check against the unsimplified reference.
    packed_f32 = pack_params(params, mxu_dtype=jnp.float32)
    out_f32 = jax.block_until_ready(cancel_drift_ctrl(t, x, packed_f32))
    assert out_f32.shape == (B, D)
    assert jnp.allclose(out_f32, ref, atol=1e-4, rtol=1e-4), float(
        jnp.max(jnp.abs(out_f32 - ref))
    )

    # bf16 MXU path (production default: bf16-native MXU, half the weight HBM/VMEM);
    # elementwise math stays f32, so only MXU rounding error vs. the f32 reference.
    packed_bf16 = pack_params(params, mxu_dtype=jnp.bfloat16)
    out_bf16 = jax.block_until_ready(cancel_drift_ctrl(t, x, packed_bf16))
    assert out_bf16.shape == (B, D)
    assert jnp.allclose(out_bf16, ref, atol=3e-2, rtol=3e-2), float(
        jnp.max(jnp.abs(out_bf16 - ref))
    )

    print("KERNEL_OK")
</pallas_src>

<mosaic_0001>
module attributes {stable_mosaic.version = 11 : i64} {
  func.func @cancel_drift_kernel(%arg0: i32, %arg1: memref<8x1xf32, #tpu.memory_space<vmem>>, %arg2: memref<8x16xf32, #tpu.memory_space<vmem>>, %arg3: memref<16x256xf32, #tpu.memory_space<vmem>>, %arg4: memref<2x256xf32, #tpu.memory_space<vmem>>, %arg5: memref<128x16xf32, #tpu.memory_space<vmem>>, %arg6: memref<128x16xf32, #tpu.memory_space<vmem>>, %arg7: memref<2x16xf32, #tpu.memory_space<vmem>>, %arg8: memref<8x16xf32, #tpu.memory_space<vmem>>) attributes {dimension_semantics = [#tpu.dimension_semantics<parallel>], iteration_bounds = array<i64: 1>, scalar_prefetch = 0 : i64, scratch_operands = 0 : i64, tpu.core_type = #tpu.core_type<tc>, window_params = [{transform_indices = @transform_0, window_bounds = array<i64: 8, 1>}, {transform_indices = @transform_1, window_bounds = array<i64: 8, 16>}, {pipeline_mode = #tpu.pipeline_mode<synchronous>, transform_indices = @transform_2, window_bounds = array<i64: 16, 256>}, {pipeline_mode = #tpu.pipeline_mode<synchronous>, transform_indices = @transform_3, window_bounds = array<i64: 2, 256>}, {pipeline_mode = #tpu.pipeline_mode<synchronous>, transform_indices = @transform_4, window_bounds = array<i64: 128, 16>}, {pipeline_mode = #tpu.pipeline_mode<synchronous>, transform_indices = @transform_5, window_bounds = array<i64: 128, 16>}, {pipeline_mode = #tpu.pipeline_mode<synchronous>, transform_indices = @transform_6, window_bounds = array<i64: 2, 16>}, {transform_indices = @transform_7, window_bounds = array<i64: 8, 16>}]} {
    %c0 = arith.constant 0 : index
    %c0_0 = arith.constant 0 : index
    %0 = vector.load %arg1[%c0, %c0_0] : memref<8x1xf32, #tpu.memory_space<vmem>>, vector<8x1xf32>
    %c0_1 = arith.constant 0 : index
    %c0_2 = arith.constant 0 : index
    %1 = vector.load %arg2[%c0_1, %c0_2] : memref<8x16xf32, #tpu.memory_space<vmem>>, vector<8x16xf32>
    %c0_3 = arith.constant 0 : index
    %c0_4 = arith.constant 0 : index
    %2 = vector.load %arg4[%c0_3, %c0_4] : memref<2x256xf32, #tpu.memory_space<vmem>>, vector<2x256xf32>
    %3 = vector.extract_strided_slice %2 {offsets = [0, 0], sizes = [1, 256], strides = [1, 1]} : vector<2x256xf32> to vector<1x256xf32>
    %4 = vector.extract_strided_slice %2 {offsets = [1, 0], sizes = [1, 256], strides = [1, 1]} : vector<2x256xf32> to vector<1x256xf32>
    %c0_5 = arith.constant 0 : index
    %c0_6 = arith.constant 0 : index
    %5 = vector.load %arg7[%c0_5, %c0_6] : memref<2x16xf32, #tpu.memory_space<vmem>>, vector<2x16xf32>
    %c0_7 = arith.constant 0 : index
    %c0_8 = arith.constant 0 : index
    %6 = vector.load %arg3[%c0_7, %c0_8] : memref<16x256xf32, #tpu.memory_space<vmem>>, vector<16x256xf32>
    %cst = arith.constant dense<0.000000e+00> : vector<8x256xf32>
    %7 = tpu.matmul %1, %6, %cst {dimension_numbers = #tpu.dot_dimension_numbers<[1], [0], [0], [1], [0, 0, 1, 1], [], []>} : vector<8x16xf32>, vector<16x256xf32>, vector<8x256xf32> -> vector<8x256xf32>
    %8 = vector.broadcast %0 : vector<8x1xf32> to vector<8x256xf32>
    %9 = vector.broadcast %3 : vector<1x256xf32> to vector<8x256xf32>
    %10 = arith.mulf %8, %9 : vector<8x256xf32>
    %11 = arith.addf %7, %10 : vector<8x256xf32>
    %12 = vector.broadcast %4 : vector<1x256xf32> to vector<8x256xf32>
    %13 = arith.addf %11, %12 : vector<8x256xf32>
    %14 = vector.extract_strided_slice %13 {offsets = [0, 0], sizes = [8, 128], strides = [1, 1]} : vector<8x256xf32> to vector<8x128xf32>
    %15 = math.tanh %14 : vector<8x128xf32>
    %c0_9 = arith.constant 0 : index
    %c0_10 = arith.constant 0 : index
    %16 = vector.load %arg5[%c0_9, %c0_10] : memref<128x16xf32, #tpu.memory_space<vmem>>, vector<128x16xf32>
    %cst_11 = arith.constant dense<0.000000e+00> : vector<8x16xf32>
    %17 = tpu.matmul %15, %16, %cst_11 {dimension_numbers = #tpu.dot_dimension_numbers<[1], [0], [0], [1], [0, 0, 1, 1], [], []>} : vector<8x128xf32>, vector<128x16xf32>, vector<8x16xf32> -> vector<8x16xf32>
    %18 = vector.extract_strided_slice %5 {offsets = [0, 0], sizes = [1, 16], strides = [1, 1]} : vector<2x16xf32> to vector<1x16xf32>
    %19 = vector.broadcast %18 : vector<1x16xf32> to vector<8x16xf32>
    %20 = arith.addf %17, %19 : vector<8x16xf32>
    %21 = arith.mulf %20, %20 : vector<8x16xf32>
    %cst_12 = arith.constant dense<0.000000e+00> : vector<8xf32>
    %22 = vector.multi_reduction <add>, %21, %cst_12 [1] : vector<8x16xf32> to vector<8xf32>
    %23 = vector.shape_cast %22 : vector<8xf32> to vector<8x1xf32>
    %cst_13 = arith.constant 1.000000e-24 : f32
    %24 = vector.broadcast %cst_13 : f32 to vector<8x1xf32>
    %25 = arith.addf %23, %24 : vector<8x1xf32>
    %26 = math.rsqrt %25 : vector<8x1xf32>
    %cst_14 = arith.constant 1.000000e+01 : f32
    %27 = vector.broadcast %cst_14 : f32 to vector<8x1xf32>
    %28 = arith.mulf %27, %26 : vector<8x1xf32>
    %cst_15 = arith.constant 1.000000e+00 : f32
    %29 = vector.broadcast %cst_15 : f32 to vector<8x1xf32>
    %30 = arith.minimumf %29, %28 : vector<8x1xf32>
    %31 = vector.broadcast %30 : vector<8x1xf32> to vector<8x16xf32>
    %32 = arith.mulf %20, %31 : vector<8x16xf32>
    %33 = vector.extract_strided_slice %13 {offsets = [0, 128], sizes = [8, 128], strides = [1, 1]} : vector<8x256xf32> to vector<8x128xf32>
    %34 = math.tanh %33 : vector<8x128xf32>
    %c0_16 = arith.constant 0 : index
    %c0_17 = arith.constant 0 : index
    %35 = vector.load %arg6[%c0_16, %c0_17] : memref<128x16xf32, #tpu.memory_space<vmem>>, vector<128x16xf32>
    %cst_18 = arith.constant dense<0.000000e+00> : vector<8x16xf32>
    %36 = tpu.matmul %34, %35, %cst_18 {dimension_numbers = #tpu.dot_dimension_numbers<[1], [0], [0], [1], [0, 0, 1, 1], [], []>} : vector<8x128xf32>, vector<128x16xf32>, vector<8x16xf32> -> vector<8x16xf32>
    %37 = vector.extract_strided_slice %5 {offsets = [1, 0], sizes = [1, 16], strides = [1, 1]} : vector<2x16xf32> to vector<1x16xf32>
    %38 = vector.broadcast %37 : vector<1x16xf32> to vector<8x16xf32>
    %39 = arith.addf %36, %38 : vector<8x16xf32>
    %40 = arith.mulf %39, %39 : vector<8x16xf32>
    %cst_19 = arith.constant dense<0.000000e+00> : vector<8xf32>
    %41 = vector.multi_reduction <add>, %40, %cst_19 [1] : vector<8x16xf32> to vector<8xf32>
    %42 = vector.shape_cast %41 : vector<8xf32> to vector<8x1xf32>
    %cst_20 = arith.constant 1.000000e-24 : f32
    %43 = vector.broadcast %cst_20 : f32 to vector<8x1xf32>
    %44 = arith.addf %42, %43 : vector<8x1xf32>
    %45 = math.rsqrt %44 : vector<8x1xf32>
    %cst_21 = arith.constant 1.000000e+01 : f32
    %46 = vector.broadcast %cst_21 : f32 to vector<8x1xf32>
    %47 = arith.mulf %46, %45 : vector<8x1xf32>
    %cst_22 = arith.constant 1.000000e+00 : f32
    %48 = vector.broadcast %cst_22 : f32 to vector<8x1xf32>
    %49 = arith.minimumf %48, %47 : vector<8x1xf32>
    %50 = vector.broadcast %49 : vector<8x1xf32> to vector<8x16xf32>
    %51 = arith.mulf %39, %50 : vector<8x16xf32>
    %52 = arith.mulf %1, %1 : vector<8x16xf32>
    %cst_23 = arith.constant dense<0.000000e+00> : vector<8xf32>
    %53 = vector.multi_reduction <add>, %52, %cst_23 [1] : vector<8x16xf32> to vector<8xf32>
    %54 = vector.shape_cast %53 : vector<8xf32> to vector<8x1xf32>
    %cst_24 = arith.constant 1.000000e-24 : f32
    %55 = vector.broadcast %cst_24 : f32 to vector<8x1xf32>
    %56 = arith.addf %54, %55 : vector<8x1xf32>
    %57 = math.rsqrt %56 : vector<8x1xf32>
    %cst_25 = arith.constant 1.000000e+01 : f32
    %58 = vector.broadcast %cst_25 : f32 to vector<8x1xf32>
    %59 = arith.mulf %58, %57 : vector<8x1xf32>
    %cst_26 = arith.constant 1.000000e+00 : f32
    %60 = vector.broadcast %cst_26 : f32 to vector<8x1xf32>
    %61 = arith.minimumf %60, %59 : vector<8x1xf32>
    %cst_27 = arith.constant 4.900000e+00 : f32
    %62 = vector.broadcast %cst_27 : f32 to vector<8x1xf32>
    %63 = arith.mulf %0, %62 : vector<8x1xf32>
    %cst_28 = arith.constant 1.000000e-01 : f32
    %64 = vector.broadcast %cst_28 : f32 to vector<8x1xf32>
    %65 = arith.addf %64, %63 : vector<8x1xf32>
    %66 = math.sqrt %65 : vector<8x1xf32>
    %cst_29 = arith.constant 5.000000e-01 : f32
    %67 = vector.broadcast %cst_29 : f32 to vector<8x1xf32>
    %68 = arith.mulf %67, %66 : vector<8x1xf32>
    %69 = vector.broadcast %68 : vector<8x1xf32> to vector<8x16xf32>
    %70 = arith.mulf %69, %1 : vector<8x16xf32>
    %cst_30 = arith.constant 1.000000e+00 : f32
    %71 = vector.broadcast %cst_30 : f32 to vector<8x1xf32>
    %72 = arith.mulf %71, %61 : vector<8x1xf32>
    %73 = vector.broadcast %72 : vector<8x1xf32> to vector<8x16xf32>
    %74 = arith.mulf %73, %51 : vector<8x16xf32>
    %cst_31 = arith.constant 1.000000e+00 : f32
    %75 = vector.broadcast %cst_31 : f32 to vector<8x16xf32>
    %76 = arith.addf %75, %74 : vector<8x16xf32>
    %77 = arith.mulf %70, %76 : vector<8x16xf32>
    %78 = arith.subf %32, %77 : vector<8x16xf32>
    %c0_32 = arith.constant 0 : index
    %c0_33 = arith.constant 0 : index
    %79 = vector.load %arg8[%c0_32, %c0_33] : memref<8x16xf32, #tpu.memory_space<vmem>>, vector<8x16xf32>
    tpu.vector_store %arg8[%c0_32, %c0_33], %78 {strides = array<i32>} : memref<8x16xf32, #tpu.memory_space<vmem>>, vector<8x16xf32>,
    return
  }
  func.func @transform_0(%arg0: i32) -> (i32, i32) {
    %c0_i32 = arith.constant 0 : i32
    %c0_i32_0 = arith.constant 0 : i32
    return %arg0, %c0_i32 : i32, i32
  }
  func.func @transform_1(%arg0: i32) -> (i32, i32) {
    %c0_i32 = arith.constant 0 : i32
    %c0_i32_0 = arith.constant 0 : i32
    return %arg0, %c0_i32 : i32, i32
  }
  func.func @transform_2(%arg0: i32) -> (i32, i32) {
    %c0_i32 = arith.constant 0 : i32
    %c0_i32_0 = arith.constant 0 : i32
    %c0_i32_1 = arith.constant 0 : i32
    return %c0_i32, %c0_i32_0 : i32, i32
  }
  func.func @transform_3(%arg0: i32) -> (i32, i32) {
    %c0_i32 = arith.constant 0 : i32
    %c0_i32_0 = arith.constant 0 : i32
    %c0_i32_1 = arith.constant 0 : i32
    return %c0_i32, %c0_i32_0 : i32, i32
  }
  func.func @transform_4(%arg0: i32) -> (i32, i32) {
    %c0_i32 = arith.constant 0 : i32
    %c0_i32_0 = arith.constant 0 : i32
    %c0_i32_1 = arith.constant 0 : i32
    return %c0_i32, %c0_i32_0 : i32, i32
  }
  func.func @transform_5(%arg0: i32) -> (i32, i32) {
    %c0_i32 = arith.constant 0 : i32
    %c0_i32_0 = arith.constant 0 : i32
    %c0_i32_1 = arith.constant 0 : i32
    return %c0_i32, %c0_i32_0 : i32, i32
  }
  func.func @transform_6(%arg0: i32) -> (i32, i32) {
    %c0_i32 = arith.constant 0 : i32
    %c0_i32_0 = arith.constant 0 : i32
    %c0_i32_1 = arith.constant 0 : i32
    return %c0_i32, %c0_i32_0 : i32, i32
  }
  func.func @transform_7(%arg0: i32) -> (i32, i32) {
    %c0_i32 = arith.constant 0 : i32
    %c0_i32_0 = arith.constant 0 : i32
    return %arg0, %c0_i32 : i32, i32
  }
}

</mosaic_0001>

<llo_original>
// kernel: tpu_custom_call.1
$region0: #{tpu_custom_call.1}
  #allocation0 [shape = 'u32[]', space=smem, size = 0x4, offset = 0x4, fixed_abs, tag = 'smem constant byte address 0x4 - core index']
  #allocation1 [shape = 'u32[144,128]{1,0:T(1,128)}', space=vmem, size = 0x12000, scoped, tag = 'internal scratch']
  %s0 = inlined_call_operand.vmem [shape: f32[8,1], index: 0, kind: input, shape index: {}]
  %s1 = inlined_call_operand.vmem [shape: f32[8,16], index: 1, kind: input, shape index: {}]
  %s2 = inlined_call_operand.vmem [shape: f32[16,256], index: 2, kind: input, shape index: {}]
  %s3 = inlined_call_operand.vmem [shape: f32[2,256], index: 3, kind: input, shape index: {}]
  %s4 = inlined_call_operand.vmem [shape: f32[128,16], index: 4, kind: input, shape index: {}]
  %s5 = inlined_call_operand.vmem [shape: f32[128,16], index: 5, kind: input, shape index: {}]
  %s6 = inlined_call_operand.vmem [shape: f32[2,16], index: 6, kind: input, shape index: {}]
  %s7 = inlined_call_operand.hbm [shape: f32[8,16], index: 7, kind: output, shape index: {}]
  %s8 = sld [smem:[#allocation0]]
  $region38: #{tpu_custom_call.1} parent=0
    _
  %s10 = ssub.s32 1, %s8
  %s11 = scalar_select 0, %s10, %s8
  $region1: #{tpu_custom_call.1} parent=0
    #allocation2 [shape = 'u8[4096]{0}', space=vmem, size = 0x1000, scoped, tag = 'output window, operand 0, single buffered']
    #allocation3 [shape = 's32[1]{0}', space=sflag, size = 0x4, scoped, tag = 'scoped memory for tpu_custom_call.1']
    %12 = vsyncpa [#allocation3], 0
    // Predicated region
    $region2: #{tpu_custom_call.1} parent=1 // pred_check
      _
    $region3: #{tpu_custom_call.1} parent=1 // pred_check_branch
      %14 = sbr.rel (0) target = $region5
    $region4: #{tpu_custom_call.1} parent=1 // pred_region
      _
    $region5: #{tpu_custom_call.1} parent=1 // pred_fallthru
      _
    // Predicated region
    $region6: #{tpu_custom_call.1} parent=1 // pred_check
      _
    $region7: #{tpu_custom_call.1} parent=1 // pred_check_branch
      %16 = sbr.rel (0) target = $region9
    $region8: #{tpu_custom_call.1} parent=1 // pred_region
      _
    $region9: #{tpu_custom_call.1} parent=1 // pred_fallthru
      _
    // Predicated region
    $region10: #{tpu_custom_call.1} parent=1 // pred_check
      _
    $region11: #{tpu_custom_call.1} parent=1 // pred_check_branch
      %18 = sbr.rel (0) target = $region13
    $region12: #{tpu_custom_call.1} parent=1 // pred_region
      _
    $region13: #{tpu_custom_call.1} parent=1 // pred_fallthru
      _
    // Predicated region
    $region14: #{tpu_custom_call.1} parent=1 // pred_check
      _
    $region15: #{tpu_custom_call.1} parent=1 // pred_check_branch
      %20 = sbr.rel (0) target = $region17
    $region16: #{tpu_custom_call.1} parent=1 // pred_region
      _
    $region17: #{tpu_custom_call.1} parent=1 // pred_fallthru
      _
    // Predicated region
    $region18: #{tpu_custom_call.1} parent=1 // pred_check
      _
    $region19: #{tpu_custom_call.1} parent=1 // pred_check_branch
      %22 = sbr.rel (0) target = $region21
    $region20: #{tpu_custom_call.1} parent=1 // pred_region
      _
    $region21: #{tpu_custom_call.1} parent=1 // pred_fallthru
      _
    // Predicated region
    $region22: #{tpu_custom_call.1} parent=1 // pred_check
      _
    $region23: #{tpu_custom_call.1} parent=1 // pred_check_branch
      %24 = sbr.rel (0) target = $region25
    $region24: #{tpu_custom_call.1} parent=1 // pred_region
      _
    $region25: #{tpu_custom_call.1} parent=1 // pred_fallthru
      _
    // Predicated region
    $region26: #{tpu_custom_call.1} parent=1 // pred_check
      _
    $region27: #{tpu_custom_call.1} parent=1 // pred_check_branch
      %26 = sbr.rel (0) target = $region29
    $region28: #{tpu_custom_call.1} parent=1 // pred_region
      _
    $region29: #{tpu_custom_call.1} parent=1 // pred_fallthru
      _
    %v27 = vld [vmem:[%s0] sm:$0xff]
    %v28 = vld [vmem:[%s1] sm:$0xff]
    %v29 = vld [vmem:[%s3] sm:$0xf]
    %v30 = vld [vmem:[%s6] sm:$0x3]
    %v31 = vld [vmem:[%s2] sm:$0xff]
    %v32 = vld [vmem:[%s2 + $0x8] sm:$0xff]
    %v33 = vld [vmem:[%s2 + $0x10] sm:$0xff]
    %v34 = vld [vmem:[%s2 + $0x18] sm:$0xff]
    %36 = vset.pattern.permute.xlu0 0
    %37 = vperm.xlu0 %36, %v27
    %v38 = vpop.permute.xlu0 %37
    %v41 = vlaneseq
    %v42 = vshrl.u32 %v41, 7
    %v43 = vsub.s32 0, %v42
    %v44 = vrot.slane %v29, %v43
    %v45 = vlaneseq
    %v46 = vshrl.u32 %v45, 7
    %v47 = vsub.s32 2, %v46
    %v48 = vrot.slane %v29, %v47
    %v51 = vlaneseq
    %v52 = vshrl.u32 %v51, 7
    %v53 = vsub.s32 0, %v52
    %v54 = vrot.slane %v44, %v53
    %v55 = vlaneseq
    %v56 = vshrl.u32 %v55, 7
    %v57 = vsub.s32 0, %v56
    %v58 = vrot.slane %v48, %v57
    %v59 = vmul.f32 %v38, %v54
    %v60 = vmul.f32 %v38, %v58
    %vm61 = vcmask 130048
    %v63 = vsel %vm61, %v28, 0
    %65 = vmatprep.subr.mxu0 %v32
    %66 = vmatpush1.msra.mxu0 %v31
    %67 = vmatprep.subr.mxu0 %v34
    %68 = vmatpush1.msra.mxu0 %v33
    %69 = vmatprep.subr.mxu0 0.0
    %70 = vmatpush1.msra.mxu0 0.0
    %71 = vmatprep.subr.mxu0 0.0
    %72 = vmatpush1.msra.mxu0 0.0
    %73 = vmatprep.subr.mxu0 0.0
    %74 = vmatpush1.msra.mxu0 0.0
    %75 = vmatprep.subr.mxu0 0.0
    %76 = vmatpush1.msra.mxu0 0.0
    %77 = vmatprep.subr.mxu0 0.0
    %78 = vmatpush1.msra.mxu0 0.0
    %79 = vmatprep.subr.mxu0 0.0
    %80 = vmatpush1.msra.mxu0 0.0
    %81 = vmatprep.subr.mxu0 0.0
    %82 = vmatpush1.msra.mxu0 0.0
    %83 = vmatprep.subr.mxu0 0.0
    %84 = vmatpush1.msra.mxu0 0.0
    %85 = vmatprep.subr.mxu0 0.0
    %86 = vmatpush1.msra.mxu0 0.0
    %87 = vmatprep.subr.mxu0 0.0
    %88 = vmatpush1.msra.mxu0 0.0
    %89 = vmatprep.subr.mxu0 0.0
    %90 = vmatpush1.msra.mxu0 0.0
    %91 = vmatprep.subr.mxu0 0.0
    %92 = vmatpush1.msra.mxu0 0.0
    %93 = vmatprep.subr.mxu0 0.0
    %94 = vmatpush1.msra.mxu0 0.0
    %95 = vmatprep.subr.mxu0 0.0
    %96 = vmatpush1.msra.mxu0 0.0
    %97 = vmatprep.subr.mxu0 0.0
    %98 = vmatpush1.msra.mxu0 0.0
    %99 = vmatprep.subr.mxu0 0.0
    %100 = vmatpush1.msra.mxu0 0.0
    %101 = vmatprep.subr.mxu0 0.0
    %102 = vmatpush1.msra.mxu0 0.0
    %103 = vmatprep.subr.mxu0 0.0
    %104 = vmatpush1.msra.mxu0 0.0
    %105 = vmatprep.subr.mxu0 0.0
    %106 = vmatpush1.msra.mxu0 0.0
    %107 = vmatprep.subr.mxu0 0.0
    %108 = vmatpush1.msra.mxu0 0.0
    %109 = vmatprep.subr.mxu0 0.0
    %110 = vmatpush1.msra.mxu0 0.0
    %111 = vmatprep.subr.mxu0 0.0
    %112 = vmatpush1.msra.mxu0 0.0
    %113 = vmatprep.subr.mxu0 0.0
    %114 = vmatpush1.msra.mxu0 0.0
    %115 = vmatprep.subr.mxu0 0.0
    %116 = vmatpush1.msra.mxu0 0.0
    %117 = vmatprep.subr.mxu0 0.0
    %118 = vmatpush1.msra.mxu0 0.0
    %119 = vmatprep.subr.mxu0 0.0
    %120 = vmatpush1.msra.mxu0 0.0
    %121 = vmatprep.subr.mxu0 0.0
    %122 = vmatpush1.msra.mxu0 0.0
    %123 = vmatprep.subr.mxu0 0.0
    %124 = vmatpush1.msra.mxu0 0.0
    %125 = vmatprep.subr.mxu0 0.0
    %126 = vmatpush1.msra.mxu0 0.0
    %127 = vmatprep.subr.mxu0 0.0
    %128 = vmatpush1.msra.mxu0 0.0
    %129 = vmatprep.mubr.f32.mxu0 0.0
    %130 = vmatmul.mubr.f32.gmra.mrb[0].mxu0 %v63
    %v131 = vpop.f32.mrb[0].mxu0
    %v132 = vadd.f32 %v59, %v131
    %v133 = vpop.f32.mrb[0].mxu0
    %v134 = vadd.f32 %v60, %v133
    %135 = vdwg.mxu0
    %v136 = vlaneseq
    %v137 = vshrl.u32 %v136, 7
    %v138 = vsub.s32 1, %v137
    %v139 = vrot.slane %v29, %v138
    %v140 = vlaneseq
    %v141 = vshrl.u32 %v140, 7
    %v142 = vsub.s32 3, %v141
    %v143 = vrot.slane %v29, %v142
    %v146 = vlaneseq
    %v147 = vshrl.u32 %v146, 7
    %v148 = vsub.s32 1, %v147
    %v149 = vrot.slane %v139, %v148
    %v150 = vlaneseq
    %v151 = vshrl.u32 %v150, 7
    %v152 = vsub.s32 1, %v151
    %v153 = vrot.slane %v143, %v152
    %v154 = vadd.f32 %v132, %v149
    %v155 = vadd.f32 %v134, %v153
    %v156 = vtanh.pop %v154
    %v157 = vld [vmem:[%s4] sm:$0xff]
    %v158 = vld [vmem:[%s4 + $0x8] sm:$0xff]
    %v159 = vld [vmem:[%s4 + $0x10] sm:$0xff]
    %v160 = vld [vmem:[%s4 + $0x18] sm:$0xff]
    %v161 = vld [vmem:[%s4 + $0x20] sm:$0xff]
    %v162 = vld [vmem:[%s4 + $0x28] sm:$0xff]
    %v163 = vld [vmem:[%s4 + $0x30] sm:$0xff]
    %v164 = vld [vmem:[%s4 + $0x38] sm:$0xff]
    %v165 = vld [vmem:[%s4 + $0x40] sm:$0xff]
    %v166 = vld [vmem:[%s4 + $0x48] sm:$0xff]
    %v167 = vld [vmem:[%s4 + $0x50] sm:$0xff]
    %v168 = vld [vmem:[%s4 + $0x58] sm:$0xff]
    %v169 = vld [vmem:[%s4 + $0x60] sm:$0xff]
    %v170 = vld [vmem:[%s4 + $0x68] sm:$0xff]
    %v171 = vld [vmem:[%s4 + $0x70] sm:$0xff]
    %v172 = vld [vmem:[%s4 + $0x78] sm:$0xff]
    %v173 = vlaneseq
    %v174 = vshrl.u32 %v173, 7
    %v175 = vsub.s32 0, %v174
    %v176 = vrot.slane %v30, %v175
    %177 = vmatprep.subr.mxu0 0.0
    %178 = vmatpush1.msra.mxu0 %v157
    %179 = vmatprep.subr.mxu0 0.0
    %180 = vmatpush1.msra.mxu0 %v158
    %181 = vmatprep.subr.mxu0 0.0
    %182 = vmatpush1.msra.mxu0 %v159
    %183 = vmatprep.subr.mxu0 0.0
    %184 = vmatpush1.msra.mxu0 %v160
    %185 = vmatprep.subr.mxu0 0.0
    %186 = vmatpush1.msra.mxu0 %v161
    %187 = vmatprep.subr.mxu0 0.0
    %188 = vmatpush1.msra.mxu0 %v162
    %189 = vmatprep.subr.mxu0 0.0
    %190 = vmatpush1.msra.mxu0 %v163
    %191 = vmatprep.subr.mxu0 0.0
    %192 = vmatpush1.msra.mxu0 %v164
    %193 = vmatprep.subr.mxu0 0.0
    %194 = vmatpush1.msra.mxu0 %v165
    %195 = vmatprep.subr.mxu0 0.0
    %196 = vmatpush1.msra.mxu0 %v166
    %197 = vmatprep.subr.mxu0 0.0
    %198 = vmatpush1.msra.mxu0 %v167
    %199 = vmatprep.subr.mxu0 0.0
    %200 = vmatpush1.msra.mxu0 %v168
    %201 = vmatprep.subr.mxu0 0.0
    %202 = vmatpush1.msra.mxu0 %v169
    %203 = vmatprep.subr.mxu0 0.0
    %204 = vmatpush1.msra.mxu0 %v170
    %205 = vmatprep.subr.mxu0 0.0
    %206 = vmatpush1.msra.mxu0 %v171
    %207 = vmatprep.subr.mxu0 0.0
    %208 = vmatpush1.msra.mxu0 %v172
    %209 = vmatprep.subr.mxu0 0.0
    %210 = vmatpush1.msra.mxu0 0.0
    %211 = vmatprep.subr.mxu0 0.0
    %212 = vmatpush1.msra.mxu0 0.0
    %213 = vmatprep.subr.mxu0 0.0
    %214 = vmatpush1.msra.mxu0 0.0
    %215 = vmatprep.subr.mxu0 0.0
    %216 = vmatpush1.msra.mxu0 0.0
    %217 = vmatprep.subr.mxu0 0.0
    %218 = vmatpush1.msra.mxu0 0.0
    %219 = vmatprep.subr.mxu0 0.0
    %220 = vmatpush1.msra.mxu0 0.0
    %221 = vmatprep.subr.mxu0 0.0
    %222 = vmatpush1.msra.mxu0 0.0
    %223 = vmatprep.subr.mxu0 0.0
    %224 = vmatpush1.msra.mxu0 0.0
    %225 = vmatprep.subr.mxu0 0.0
    %226 = vmatpush1.msra.mxu0 0.0
    %227 = vmatprep.subr.mxu0 0.0
    %228 = vmatpush1.msra.mxu0 0.0
    %229 = vmatprep.subr.mxu0 0.0
    %230 = vmatpush1.msra.mxu0 0.0
    %231 = vmatprep.subr.mxu0 0.0
    %232 = vmatpush1.msra.mxu0 0.0
    %233 = vmatprep.subr.mxu0 0.0
    %234 = vmatpush1.msra.mxu0 0.0
    %235 = vmatprep.subr.mxu0 0.0
    %236 = vmatpush1.msra.mxu0 0.0
    %237 = vmatprep.subr.mxu0 0.0
    %238 = vmatpush1.msra.mxu0 0.0
    %239 = vmatprep.subr.mxu0 0.0
    %240 = vmatpush1.msra.mxu0 0.0
    %241 = vmatprep.mubr.f32.mxu0 0.0
    %242 = vmatmul.mubr.f32.gmra.mrb[0].mxu0 %v156
    %v243 = vpop.f32.mrb[0].mxu0
    %v244 = vadd.f32 %v176, %v243
    %v245 = vpop.f32.mrb[0].mxu0
    %246 = vdwg.mxu0
    %v247 = vmul.f32 %v244, %v244
    %v248 = vsel %vm61, %v247, 0.0
    %249 = vadd.xlane.f32.xlu0 %v248
    %v250 = vpop.xlane.xlu0 %249
    %v251 = vadd.f32 %v250, 1e-24
    %v252 = vrsqrt.pop %v251
    %v253 = vmul.f32 %v252, 10.0
    %v254 = vmin.f32 %v253, 1.0
    %v255 = vmul.f32 %v244, %v254
    %v256 = vtanh.pop %v155
    %v257 = vld [vmem:[%s5] sm:$0xff]
    %v258 = vld [vmem:[%s5 + $0x8] sm:$0xff]
    %v259 = vld [vmem:[%s5 + $0x10] sm:$0xff]
    %v260 = vld [vmem:[%s5 + $0x18] sm:$0xff]
    %v261 = vld [vmem:[%s5 + $0x20] sm:$0xff]
    %v262 = vld [vmem:[%s5 + $0x28] sm:$0xff]
    %v263 = vld [vmem:[%s5 + $0x30] sm:$0xff]
    %v264 = vld [vmem:[%s5 + $0x38] sm:$0xff]
    %v265 = vld [vmem:[%s5 + $0x40] sm:$0xff]
    %v266 = vld [vmem:[%s5 + $0x48] sm:$0xff]
    %v267 = vld [vmem:[%s5 + $0x50] sm:$0xff]
    %v268 = vld [vmem:[%s5 + $0x58] sm:$0xff]
    %v269 = vld [vmem:[%s5 + $0x60] sm:$0xff]
    %v270 = vld [vmem:[%s5 + $0x68] sm:$0xff]
    %v271 = vld [vmem:[%s5 + $0x70] sm:$0xff]
    %v272 = vld [vmem:[%s5 + $0x78] sm:$0xff]
    %v273 = vlaneseq
    %v274 = vshrl.u32 %v273, 7
    %v275 = vsub.s32 1, %v274
    %v276 = vrot.slane %v30, %v275
    %277 = vmatprep.subr.mxu0 0.0
    %278 = vmatpush1.msra.mxu0 %v257
    %279 = vmatprep.subr.mxu0 0.0
    %280 = vmatpush1.msra.mxu0 %v258
    %281 = vmatprep.subr.mxu0 0.0
    %282 = vmatpush1.msra.mxu0 %v259
    %283 = vmatprep.subr.mxu0 0.0
    %284 = vmatpush1.msra.mxu0 %v260
    %285 = vmatprep.subr.mxu0 0.0
    %286 = vmatpush1.msra.mxu0 %v261
    %287 = vmatprep.subr.mxu0 0.0
    %288 = vmatpush1.msra.mxu0 %v262
    %289 = vmatprep.subr.mxu0 0.0
    %290 = vmatpush1.msra.mxu0 %v263
    %291 = vmatprep.subr.mxu0 0.0
    %292 = vmatpush1.msra.mxu0 %v264
    %293 = vmatprep.subr.mxu0 0.0
    %294 = vmatpush1.msra.mxu0 %v265
    %295 = vmatprep.subr.mxu0 0.0
    %296 = vmatpush1.msra.mxu0 %v266
    %297 = vmatprep.subr.mxu0 0.0
    %298 = vmatpush1.msra.mxu0 %v267
    %299 = vmatprep.subr.mxu0 0.0
    %300 = vmatpush1.msra.mxu0 %v268
    %301 = vmatprep.subr.mxu0 0.0
    %302 = vmatpush1.msra.mxu0 %v269
    %303 = vmatprep.subr.mxu0 0.0
    %304 = vmatpush1.msra.mxu0 %v270
    %305 = vmatprep.subr.mxu0 0.0
    %306 = vmatpush1.msra.mxu0 %v271
    %307 = vmatprep.subr.mxu0 0.0
    %308 = vmatpush1.msra.mxu0 %v272
    %309 = vmatprep.subr.mxu0 0.0
    %310 = vmatpush1.msra.mxu0 0.0
    %311 = vmatprep.subr.mxu0 0.0
    %312 = vmatpush1.msra.mxu0 0.0
    %313 = vmatprep.subr.mxu0 0.0
    %314 = vmatpush1.msra.mxu0 0.0
    %315 = vmatprep.subr.mxu0 0.0
    %316 = vmatpush1.msra.mxu0 0.0
    %317 = vmatprep.subr.mxu0 0.0
    %318 = vmatpush1.msra.mxu0 0.0
    %319 = vmatprep.subr.mxu0 0.0
    %320 = vmatpush1.msra.mxu0 0.0
    %321 = vmatprep.subr.mxu0 0.0
    %322 = vmatpush1.msra.mxu0 0.0
    %323 = vmatprep.subr.mxu0 0.0
    %324 = vmatpush1.msra.mxu0 0.0
    %325 = vmatprep.subr.mxu0 0.0
    %326 = vmatpush1.msra.mxu0 0.0
    %327 = vmatprep.subr.mxu0 0.0
    %328 = vmatpush1.msra.mxu0 0.0
    %329 = vmatprep.subr.mxu0 0.0
    %330 = vmatpush1.msra.mxu0 0.0
    %331 = vmatprep.subr.mxu0 0.0
    %332 = vmatpush1.msra.mxu0 0.0
    %333 = vmatprep.subr.mxu0 0.0
    %334 = vmatpush1.msra.mxu0 0.0
    %335 = vmatprep.subr.mxu0 0.0
    %336 = vmatpush1.msra.mxu0 0.0
    %337 = vmatprep.subr.mxu0 0.0
    %338 = vmatpush1.msra.mxu0 0.0
    %339 = vmatprep.subr.mxu0 0.0
    %340 = vmatpush1.msra.mxu0 0.0
    %341 = vmatprep.mubr.f32.mxu0 0.0
    %342 = vmatmul.mubr.f32.gmra.mrb[0].mxu0 %v256
    %v343 = vpop.f32.mrb[0].mxu0
    %v344 = vadd.f32 %v276, %v343
    %v345 = vpop.f32.mrb[0].mxu0
    %346 = vdwg.mxu0
    %v347 = vmul.f32 %v344, %v344
    %v348 = vsel %vm61, %v347, 0.0
    %349 = vadd.xlane.f32.xlu0 %v348
    %v350 = vpop.xlane.xlu0 %349
    %v351 = vadd.f32 %v350, 1e-24
    %v352 = vrsqrt.pop %v351
    %v353 = vmul.f32 %v352, 10.0
    %v354 = vmin.f32 %v353, 1.0
    %v355 = vmul.f32 %v344, %v354
    %v356 = vmul.f32 %v28, %v28
    %v357 = vsel %vm61, %v356, 0.0
    %358 = vadd.xlane.f32.xlu0 %v357
    %v359 = vpop.xlane.xlu0 %358
    %v360 = vadd.f32 %v359, 1e-24
    %v361 = vrsqrt.pop %v360
    %v362 = vmul.f32 %v361, 10.0
    %v363 = vmin.f32 %v362, 1.0
    %v364 = vmul.f32 %v27, 4.9
    %v365 = vadd.f32 %v364, 0.1
    %v366 = vrsqrt.pop %v365
    %v367 = vmul.f32 %v365, %v366
    %vm368 = vcmp.eq.f32.partialorder %v365, inf
    %v369 = vsel %vm368, %v365, %v367
    %vm370 = vcmp.eq.f32.partialorder %v365, 0.0
    %v371 = vand.u32 %v365, 2147483648
    %v372 = vsel %vm370, %v371, %v369
    %v373 = vmul.f32 %v372, 0.5
    %375 = vset.pattern.permute.xlu0 0
    %376 = vperm.xlu0 %375, %v373
    %v377 = vpop.permute.xlu0 %376
    %v379 = vmul.f32 %v377, %v28
    %v380 = vmul.f32 %v363, %v355
    %v381 = vadd.f32 %v380, 1.0
    %v382 = vmul.f32 %v379, %v381
    %v383 = vsub.f32 %v255, %v382
    %384 = vst.msk [vmem:[#allocation2] sm:$0xff] %vm61, %v383
    // Predicated region
    $region30: #{tpu_custom_call.1} parent=1 // pred_check
      _
    $region31: #{tpu_custom_call.1} parent=1 // pred_check_branch
      %386 = sbr.rel (0) target = $region33
    $region32: #{tpu_custom_call.1} parent=1 // pred_region
      %s388 = ssub.s32 128, 128
      %389 = vsyncadd [#allocation3], %s388
      %s391 = sshll.u32 [#allocation2], 4
      %s392 = int_to_ptr.vmem [resolvable:$true] %s391
      %394 = dma.vmem_to_hbm [thread:$0]  %s392, 128, %s7, [#allocation3]
    $region33: #{tpu_custom_call.1} parent=1 // pred_fallthru
      _
    // Predicated region
    $region34: #{tpu_custom_call.1} parent=1 // pred_check
      _
    $region35: #{tpu_custom_call.1} parent=1 // pred_check_branch
      %396 = sbr.rel (0) target = $region37
    $region36: #{tpu_custom_call.1} parent=1 // pred_region
      %397 = dma.done [#allocation3], 128
    $region37: #{tpu_custom_call.1} parent=1 // pred_fallthru
      _
    %398 = vsyncpa [#allocation3], 1

</llo_original>
